<compile_context>
chip_gen: v6e
topology: v6e:2x2x1
jax: 0.10.0
libtpu: 0.0.40
codegen_flags: <defaults>
</compile_context>

<pallas_src>
import functools

import jax
import jax.numpy as jnp
from jax.experimental import pallas as pl
from jax.experimental.pallas import tpu as pltpu


def _round_up(x, m):
    return ((x + m - 1) // m) * m


def _fused_kernel(x_ref, wc_ref, bc_ref, wf_ref, bf_ref, out_ref, acc_ref,
                  *, tn, ts, k_pad, c_pad, hw):
    s = pl.program_id(1)

    @pl.when(s == 0)
    def _():
        acc_ref[...] = jnp.zeros_like(acc_ref)

    # im2col matmul tile: (tn*ts, k_pad) x (k_pad, c_pad) on the MXU (bf16 -> f32).
    lhs = x_ref[...].reshape(tn * ts, k_pad)
    conv = jnp.dot(lhs, wc_ref[...], preferred_element_type=jnp.float32)
    conv = jnp.maximum(conv + bc_ref[...], 0.0)                  # bias + ReLU
    # Per-image pooling partial sum over spatial rows (sublane-axis reduction).
    acc_ref[...] += jnp.sum(conv.reshape(tn, ts, c_pad), axis=1)

    @pl.when(s == pl.num_programs(1) - 1)
    def _():
        pooled = acc_ref[...] * (1.0 / float(hw))                # true H*W mean, f32
        logits = jnp.dot(pooled, wf_ref[...],
                         preferred_element_type=jnp.float32) + bf_ref[...]
        out_ref[...] = logits.astype(out_ref.dtype)


def wrapped_model_forward(x, w_conv, b_conv, w_fc, b_fc):
    """Conv2d(3x3, pad=1) -> ReLU -> GlobalAvgPool -> Linear, fused in one pallas_call."""
    n, cin, h, w = x.shape
    cout = w_conv.shape[0]
    nc = w_fc.shape[0]
    kh, kw = w_conv.shape[2], w_conv.shape[3]
    hw = h * w
    kdim = cin * kh * kw

    # ---------- host-side layout staging (outside the hot loop) ----------
    x_nhwc = jnp.transpose(x, (0, 2, 3, 1))
    x_padded = jnp.pad(x_nhwc, ((0, 0), (1, 1), (1, 1), (0, 0)))
    # Patch order (cin, kh, kw) matches w_conv.reshape(cout, cin*kh*kw).
    slices = [x_padded[:, i:i + h, j:j + w, :] for i in range(kh) for j in range(kw)]
    patches = jnp.stack(slices, axis=-1)                  # (N, H, W, Cin, kh*kw)
    patches = patches.reshape(n, hw, kdim)

    # Pad to MXU / lane-friendly sizes.
    k_pad = _round_up(kdim, 128)
    c_pad = _round_up(cout, 128)
    nc_pad = _round_up(nc, 128)

    tn = min(8, n)
    n_pad = _round_up(n, tn)

    ts = None
    for cand in (512, 256, 128, 64, 32, 16, 8):
        if hw % cand == 0:
            ts = cand
            break
    if ts is None:
        # TODO(synk): mask ragged spatial tiles instead of one full-HW tile.
        ts = hw

    patches = jnp.pad(patches, ((0, n_pad - n), (0, 0), (0, k_pad - kdim)))
    patches = patches.astype(jnp.bfloat16)

    wc = jnp.pad(w_conv.reshape(cout, kdim).T,
                 ((0, k_pad - kdim), (0, c_pad - cout))).astype(jnp.bfloat16)
    bc = jnp.pad(b_conv, (0, c_pad - cout)).reshape(1, c_pad).astype(jnp.float32)
    wf = jnp.pad(w_fc.T, ((0, c_pad - cout), (0, nc_pad - nc))).astype(jnp.float32)
    bf = jnp.pad(b_fc, (0, nc_pad - nc)).reshape(1, nc_pad).astype(jnp.float32)

    kernel = functools.partial(_fused_kernel, tn=tn, ts=ts, k_pad=k_pad,
                               c_pad=c_pad, hw=hw)

    out = pl.pallas_call(
        kernel,
        out_shape=jax.ShapeDtypeStruct((n_pad, nc_pad), jnp.float32),
        grid_spec=pltpu.PrefetchScalarGridSpec(
            num_scalar_prefetch=0,
            grid=(n_pad // tn, hw // ts),
            in_specs=[
                pl.BlockSpec((tn, ts, k_pad), lambda i, s: (i, s, 0)),   # im2col LHS
                pl.BlockSpec((k_pad, c_pad), lambda i, s: (0, 0)),       # conv weight
                pl.BlockSpec((1, c_pad), lambda i, s: (0, 0)),           # conv bias
                pl.BlockSpec((c_pad, nc_pad), lambda i, s: (0, 0)),      # fc weight
                pl.BlockSpec((1, nc_pad), lambda i, s: (0, 0)),          # fc bias
            ],
            out_specs=pl.BlockSpec((tn, nc_pad), lambda i, s: (i, 0)),
            scratch_shapes=[pltpu.VMEM((tn, c_pad), jnp.float32)],
        ),
        compiler_params=pltpu.CompilerParams(
            dimension_semantics=("parallel", "arbitrary"),
        ),
    )(patches, wc, bc, wf, bf)

    return out[:n, :nc]


def _reference_forward(x, w_conv, b_conv, w_fc, b_fc):
    y = jax.lax.conv_general_dilated(
        x, w_conv, window_strides=(1, 1), padding="SAME",
        dimension_numbers=("NCHW", "OIHW", "NCHW"))
    y = jnp.maximum(y + b_conv[None, :, None, None], 0.0)
    pooled = jnp.mean(y, axis=(2, 3))
    return pooled @ w_fc.T + b_fc


if __name__ == "__main__":
    key = jax.random.PRNGKey(0)
    kx, kw1, kb1, kw2, kb2 = jax.random.split(key, 5)

    n, cin, h, w = 2, 4, 16, 16
    cout, num_classes = 32, 10

    x = jax.random.normal(kx, (n, cin, h, w), jnp.float32)
    w_conv = jax.random.normal(kw1, (cout, cin, 3, 3), jnp.float32) * 0.1
    b_conv = jax.random.normal(kb1, (cout,), jnp.float32) * 0.1
    w_fc = jax.random.normal(kw2, (num_classes, cout), jnp.float32) * 0.1
    b_fc = jax.random.normal(kb2, (num_classes,), jnp.float32) * 0.1

    out = jax.jit(wrapped_model_forward)(x, w_conv, b_conv, w_fc, b_fc)
    out = jax.block_until_ready(out)

    ref = _reference_forward(x, w_conv, b_conv, w_fc, b_fc)
    max_err = float(jnp.max(jnp.abs(out - ref)))
    assert out.shape == (n, num_classes), out.shape
    assert jnp.allclose(out, ref, rtol=5e-2, atol=5e-2), f"max abs err {max_err}"
    print("KERNEL_OK")
</pallas_src>

<mosaic_0001>
module attributes {stable_mosaic.version = 11 : i64} {
  func.func @_fused_kernel(%arg0: i32, %arg1: i32, %arg2: memref<2x256x128xbf16, #tpu.memory_space<vmem>>, %arg3: memref<128x128xbf16, #tpu.memory_space<vmem>>, %arg4: memref<1x128xf32, #tpu.memory_space<vmem>>, %arg5: memref<128x128xf32, #tpu.memory_space<vmem>>, %arg6: memref<1x128xf32, #tpu.memory_space<vmem>>, %arg7: memref<2x128xf32, #tpu.memory_space<vmem>>, %arg8: memref<2x128xf32, #tpu.memory_space<vmem>>) attributes {dimension_semantics = [#tpu.dimension_semantics<parallel>, #tpu.dimension_semantics<arbitrary>], iteration_bounds = array<i64: 1, 1>, scalar_prefetch = 0 : i64, scratch_operands = 1 : i64, tpu.core_type = #tpu.core_type<tc>, window_params = [{transform_indices = @transform_0, window_bounds = array<i64: 2, 256, 128>}, {pipeline_mode = #tpu.pipeline_mode<synchronous>, transform_indices = @transform_1, window_bounds = array<i64: 128, 128>}, {pipeline_mode = #tpu.pipeline_mode<synchronous>, transform_indices = @transform_2, window_bounds = array<i64: 1, 128>}, {pipeline_mode = #tpu.pipeline_mode<synchronous>, transform_indices = @transform_3, window_bounds = array<i64: 128, 128>}, {pipeline_mode = #tpu.pipeline_mode<synchronous>, transform_indices = @transform_4, window_bounds = array<i64: 1, 128>}, {transform_indices = @transform_5, window_bounds = array<i64: 2, 128>}]} {
    %c0_i32 = arith.constant 0 : i32
    %0 = arith.cmpi eq, %arg1, %c0_i32 : i32
    %1 = arith.extui %0 : i1 to i32
    %c0_i32_0 = arith.constant 0 : i32
    %2 = arith.cmpi ne, %1, %c0_i32_0 : i32
    scf.if %2 {
      %cst_15 = arith.constant 0.000000e+00 : f32
      %20 = vector.broadcast %cst_15 : f32 to vector<2x128xf32>
      %c0_16 = arith.constant 0 : index
      %c0_17 = arith.constant 0 : index
      %21 = vector.load %arg8[%c0_16, %c0_17] : memref<2x128xf32, #tpu.memory_space<vmem>>, vector<2x128xf32>
      tpu.vector_store %arg8[%c0_16, %c0_17], %20 {strides = array<i32>} : memref<2x128xf32, #tpu.memory_space<vmem>>, vector<2x128xf32>,
    } else {
    }
    %c0 = arith.constant 0 : index
    %c0_1 = arith.constant 0 : index
    %c0_2 = arith.constant 0 : index
    %3 = vector.load %arg2[%c0, %c0_1, %c0_2] : memref<2x256x128xbf16, #tpu.memory_space<vmem>>, vector<2x256x128xbf16>
    %4 = vector.shape_cast %3 : vector<2x256x128xbf16> to vector<512x128xbf16>
    %c0_3 = arith.constant 0 : index
    %c0_4 = arith.constant 0 : index
    %5 = vector.load %arg3[%c0_3, %c0_4] : memref<128x128xbf16, #tpu.memory_space<vmem>>, vector<128x128xbf16>
    %cst = arith.constant dense<0.000000e+00> : vector<512x128xf32>
    %6 = tpu.matmul %4, %5, %cst {dimension_numbers = #tpu.dot_dimension_numbers<[1], [0], [0], [1], [0, 0, 1, 1], [], []>} : vector<512x128xbf16>, vector<128x128xbf16>, vector<512x128xf32> -> vector<512x128xf32>
    %c0_5 = arith.constant 0 : index
    %c0_6 = arith.constant 0 : index
    %7 = vector.load %arg4[%c0_5, %c0_6] : memref<1x128xf32, #tpu.memory_space<vmem>>, vector<1x128xf32>
    %8 = vector.broadcast %7 : vector<1x128xf32> to vector<512x128xf32>
    %9 = arith.addf %6, %8 : vector<512x128xf32>
    %cst_7 = arith.constant 0.000000e+00 : f32
    %10 = vector.broadcast %cst_7 : f32 to vector<512x128xf32>
    %11 = arith.maximumf %9, %10 : vector<512x128xf32>
    %c0_8 = arith.constant 0 : index
    %c0_9 = arith.constant 0 : index
    %12 = vector.load %arg8[%c0_8, %c0_9] : memref<2x128xf32, #tpu.memory_space<vmem>>, vector<2x128xf32>
    %13 = vector.shape_cast %11 : vector<512x128xf32> to vector<2x256x128xf32>
    %cst_10 = arith.constant dense<0.000000e+00> : vector<2x128xf32>
    %14 = vector.multi_reduction <add>, %13, %cst_10 [1] : vector<2x256x128xf32> to vector<2x128xf32>
    %15 = arith.addf %12, %14 : vector<2x128xf32>
    %c0_11 = arith.constant 0 : index
    %c0_12 = arith.constant 0 : index
    %16 = vector.load %arg8[%c0_11, %c0_12] : memref<2x128xf32, #tpu.memory_space<vmem>>, vector<2x128xf32>
    tpu.vector_store %arg8[%c0_11, %c0_12], %15 {strides = array<i32>} : memref<2x128xf32, #tpu.memory_space<vmem>>, vector<2x128xf32>,
    %c0_i32_13 = arith.constant 0 : i32
    %17 = arith.cmpi eq, %arg1, %c0_i32_13 : i32
    %18 = arith.extui %17 : i1 to i32
    %c0_i32_14 = arith.constant 0 : i32
    %19 = arith.cmpi ne, %18, %c0_i32_14 : i32
    scf.if %19 {
      %c0_15 = arith.constant 0 : index
      %c0_16 = arith.constant 0 : index
      %20 = vector.load %arg8[%c0_15, %c0_16] : memref<2x128xf32, #tpu.memory_space<vmem>>, vector<2x128xf32>
      %cst_17 = arith.constant 3.906250e-03 : f32
      %21 = vector.broadcast %cst_17 : f32 to vector<2x128xf32>
      %22 = arith.mulf %20, %21 : vector<2x128xf32>
      %c0_18 = arith.constant 0 : index
      %c0_19 = arith.constant 0 : index
      %23 = vector.load %arg5[%c0_18, %c0_19] : memref<128x128xf32, #tpu.memory_space<vmem>>, vector<128x128xf32>
      %cst_20 = arith.constant dense<0.000000e+00> : vector<2x128xf32>
      %24 = tpu.matmul %22, %23, %cst_20 {dimension_numbers = #tpu.dot_dimension_numbers<[1], [0], [0], [1], [0, 0, 1, 1], [], []>} : vector<2x128xf32>, vector<128x128xf32>, vector<2x128xf32> -> vector<2x128xf32>
      %c0_21 = arith.constant 0 : index
      %c0_22 = arith.constant 0 : index
      %25 = vector.load %arg6[%c0_21, %c0_22] : memref<1x128xf32, #tpu.memory_space<vmem>>, vector<1x128xf32>
      %26 = vector.broadcast %25 : vector<1x128xf32> to vector<2x128xf32>
      %27 = arith.addf %24, %26 : vector<2x128xf32>
      %c0_23 = arith.constant 0 : index
      %c0_24 = arith.constant 0 : index
      %28 = vector.load %arg7[%c0_23, %c0_24] : memref<2x128xf32, #tpu.memory_space<vmem>>, vector<2x128xf32>
      tpu.vector_store %arg7[%c0_23, %c0_24], %27 {strides = array<i32>} : memref<2x128xf32, #tpu.memory_space<vmem>>, vector<2x128xf32>,
    } else {
    }
    return
  }
  func.func @transform_0(%arg0: i32, %arg1: i32) -> (i32, i32, i32) {
    %c0_i32 = arith.constant 0 : i32
    %c0_i32_0 = arith.constant 0 : i32
    return %arg0, %arg1, %c0_i32 : i32, i32, i32
  }
  func.func @transform_1(%arg0: i32, %arg1: i32) -> (i32, i32) {
    %c0_i32 = arith.constant 0 : i32
    %c0_i32_0 = arith.constant 0 : i32
    %c0_i32_1 = arith.constant 0 : i32
    return %c0_i32, %c0_i32_0 : i32, i32
  }
  func.func @transform_2(%arg0: i32, %arg1: i32) -> (i32, i32) {
    %c0_i32 = arith.constant 0 : i32
    %c0_i32_0 = arith.constant 0 : i32
    %c0_i32_1 = arith.constant 0 : i32
    return %c0_i32, %c0_i32_0 : i32, i32
  }
  func.func @transform_3(%arg0: i32, %arg1: i32) -> (i32, i32) {
    %c0_i32 = arith.constant 0 : i32
    %c0_i32_0 = arith.constant 0 : i32
    %c0_i32_1 = arith.constant 0 : i32
    return %c0_i32, %c0_i32_0 : i32, i32
  }
  func.func @transform_4(%arg0: i32, %arg1: i32) -> (i32, i32) {
    %c0_i32 = arith.constant 0 : i32
    %c0_i32_0 = arith.constant 0 : i32
    %c0_i32_1 = arith.constant 0 : i32
    return %c0_i32, %c0_i32_0 : i32, i32
  }
  func.func @transform_5(%arg0: i32, %arg1: i32) -> (i32, i32) {
    %c0_i32 = arith.constant 0 : i32
    %c0_i32_0 = arith.constant 0 : i32
    return %arg0, %c0_i32 : i32, i32
  }
}

</mosaic_0001>

<llo_original>
// kernel: wrapped_model_forward.1
$region0: #{wrapped_model_forward.1}
  #allocation0 [shape = 'u32[]', space=smem, size = 0x4, offset = 0x4, fixed_abs, tag = 'smem constant byte address 0x4 - core index']
  #allocation1 [shape = 'u32[144,128]{1,0:T(1,128)}', space=vmem, size = 0x12000, scoped, tag = 'internal scratch']
  #allocation2 [shape = 'f32[2,128]{1,0:T(2,128)}', space=vmem, size = 0x400, scoped, tag = 'scratch operand']
  %s0 = inlined_call_operand.vmem [shape: bf16[2,256,128], index: 0, kind: input, shape index: {}]
  %s1 = inlined_call_operand.vmem [shape: bf16[128,128], index: 1, kind: input, shape index: {}]
  %s2 = inlined_call_operand.vmem [shape: f32[1,128], index: 2, kind: input, shape index: {}]
  %s3 = inlined_call_operand.vmem [shape: f32[128,128], index: 3, kind: input, shape index: {}]
  %s4 = inlined_call_operand.vmem [shape: f32[1,128], index: 4, kind: input, shape index: {}]
  %s5 = inlined_call_operand.hbm [shape: f32[2,128], index: 5, kind: output, shape index: {}]
  %s6 = sld [smem:[#allocation0]]
  $region38: #{wrapped_model_forward.1} parent=0
    _
  %s8 = ssub.s32 1, %s6
  %s9 = scalar_select 0, %s8, %s6
  $region1: #{wrapped_model_forward.1} parent=0
    #allocation3 [shape = 'u8[1024]{0}', space=vmem, size = 0x400, scoped, tag = 'output window, operand 0, single buffered']
    #allocation4 [shape = 's32[1]{0}', space=sflag, size = 0x4, scoped, tag = 'scoped memory for wrapped_model_forward.1']
    %10 = vsyncpa [#allocation4], 0
    // Predicated region
    $region2: #{wrapped_model_forward.1} parent=1 // pred_check
      _
    $region3: #{wrapped_model_forward.1} parent=1 // pred_check_branch
      %12 = sbr.rel (0) target = $region5
    $region4: #{wrapped_model_forward.1} parent=1 // pred_region
      _
    $region5: #{wrapped_model_forward.1} parent=1 // pred_fallthru
      _
    // Predicated region
    $region6: #{wrapped_model_forward.1} parent=1 // pred_check
      _
    $region7: #{wrapped_model_forward.1} parent=1 // pred_check_branch
      %14 = sbr.rel (0) target = $region9
    $region8: #{wrapped_model_forward.1} parent=1 // pred_region
      _
    $region9: #{wrapped_model_forward.1} parent=1 // pred_fallthru
      _
    // Predicated region
    $region10: #{wrapped_model_forward.1} parent=1 // pred_check
      _
    $region11: #{wrapped_model_forward.1} parent=1 // pred_check_branch
      %16 = sbr.rel (0) target = $region13
    $region12: #{wrapped_model_forward.1} parent=1 // pred_region
      _
    $region13: #{wrapped_model_forward.1} parent=1 // pred_fallthru
      _
    // Predicated region
    $region14: #{wrapped_model_forward.1} parent=1 // pred_check
      _
    $region15: #{wrapped_model_forward.1} parent=1 // pred_check_branch
      %18 = sbr.rel (0) target = $region17
    $region16: #{wrapped_model_forward.1} parent=1 // pred_region
      _
    $region17: #{wrapped_model_forward.1} parent=1 // pred_fallthru
      _
    // Predicated region
    $region18: #{wrapped_model_forward.1} parent=1 // pred_check
      _
    $region19: #{wrapped_model_forward.1} parent=1 // pred_check_branch
      %20 = sbr.rel (0) target = $region21
    $region20: #{wrapped_model_forward.1} parent=1 // pred_region
      _
    $region21: #{wrapped_model_forward.1} parent=1 // pred_fallthru
      _
    %p22 = scmp.eq.s32.totalorder 0, 0
    // Predicated region
    $region22: #{wrapped_model_forward.1} parent=1 // pred_check
      %p23 = pneg %p22
    $region23: #{wrapped_model_forward.1} parent=1 // pred_check_branch
      %25 = sbr.rel (%p23) target = $region25
    $region24: #{wrapped_model_forward.1} parent=1 // pred_region
      %26 = vst [vmem:[#allocation2] sm:$0x3] 0.0
    $region25: #{wrapped_model_forward.1} parent=1 // pred_fallthru
      _
    %v27 = vld [vmem:[%s0] sm:$0xf]
    %v28 = vld [vmem:[%s0 + $0x4] sm:$0xf]
    %v29 = vld [vmem:[%s0 + $0x8] sm:$0xf]
    %v30 = vld [vmem:[%s0 + $0xc] sm:$0xf]
    %v31 = vld [vmem:[%s0 + $0x10] sm:$0xf]
    %v32 = vld [vmem:[%s0 + $0x14] sm:$0xf]
    %v33 = vld [vmem:[%s0 + $0x18] sm:$0xf]
    %v34 = vld [vmem:[%s0 + $0x1c] sm:$0xf]
    %v35 = vld [vmem:[%s0 + $0x20] sm:$0xf]
    %v36 = vld [vmem:[%s0 + $0x24] sm:$0xf]
    %v37 = vld [vmem:[%s0 + $0x28] sm:$0xf]
    %v38 = vld [vmem:[%s0 + $0x2c] sm:$0xf]
    %v39 = vld [vmem:[%s0 + $0x30] sm:$0xf]
    %v40 = vld [vmem:[%s0 + $0x34] sm:$0xf]
    %v41 = vld [vmem:[%s0 + $0x38] sm:$0xf]
    %v42 = vld [vmem:[%s0 + $0x3c] sm:$0xf]
    %v43 = vld [vmem:[%s0 + $0x40] sm:$0xf]
    %v44 = vld [vmem:[%s0 + $0x44] sm:$0xf]
    %v45 = vld [vmem:[%s0 + $0x48] sm:$0xf]
    %v46 = vld [vmem:[%s0 + $0x4c] sm:$0xf]
    %v47 = vld [vmem:[%s0 + $0x50] sm:$0xf]
    %v48 = vld [vmem:[%s0 + $0x54] sm:$0xf]
    %v49 = vld [vmem:[%s0 + $0x58] sm:$0xf]
    %v50 = vld [vmem:[%s0 + $0x5c] sm:$0xf]
    %v51 = vld [vmem:[%s0 + $0x60] sm:$0xf]
    %v52 = vld [vmem:[%s0 + $0x64] sm:$0xf]
    %v53 = vld [vmem:[%s0 + $0x68] sm:$0xf]
    %v54 = vld [vmem:[%s0 + $0x6c] sm:$0xf]
    %v55 = vld [vmem:[%s0 + $0x70] sm:$0xf]
    %v56 = vld [vmem:[%s0 + $0x74] sm:$0xf]
    %v57 = vld [vmem:[%s0 + $0x78] sm:$0xf]
    %v58 = vld [vmem:[%s0 + $0x7c] sm:$0xf]
    %v59 = vld [vmem:[%s0 + $0x80] sm:$0xf]
    %v60 = vld [vmem:[%s0 + $0x84] sm:$0xf]
    %v61 = vld [vmem:[%s0 + $0x88] sm:$0xf]
    %v62 = vld [vmem:[%s0 + $0x8c] sm:$0xf]
    %v63 = vld [vmem:[%s0 + $0x90] sm:$0xf]
    %v64 = vld [vmem:[%s0 + $0x94] sm:$0xf]
    %v65 = vld [vmem:[%s0 + $0x98] sm:$0xf]
    %v66 = vld [vmem:[%s0 + $0x9c] sm:$0xf]
    %v67 = vld [vmem:[%s0 + $0xa0] sm:$0xf]
    %v68 = vld [vmem:[%s0 + $0xa4] sm:$0xf]
    %v69 = vld [vmem:[%s0 + $0xa8] sm:$0xf]
    %v70 = vld [vmem:[%s0 + $0xac] sm:$0xf]
    %v71 = vld [vmem:[%s0 + $0xb0] sm:$0xf]
    %v72 = vld [vmem:[%s0 + $0xb4] sm:$0xf]
    %v73 = vld [vmem:[%s0 + $0xb8] sm:$0xf]
    %v74 = vld [vmem:[%s0 + $0xbc] sm:$0xf]
    %v75 = vld [vmem:[%s0 + $0xc0] sm:$0xf]
    %v76 = vld [vmem:[%s0 + $0xc4] sm:$0xf]
    %v77 = vld [vmem:[%s0 + $0xc8] sm:$0xf]
    %v78 = vld [vmem:[%s0 + $0xcc] sm:$0xf]
    %v79 = vld [vmem:[%s0 + $0xd0] sm:$0xf]
    %v80 = vld [vmem:[%s0 + $0xd4] sm:$0xf]
    %v81 = vld [vmem:[%s0 + $0xd8] sm:$0xf]
    %v82 = vld [vmem:[%s0 + $0xdc] sm:$0xf]
    %v83 = vld [vmem:[%s0 + $0xe0] sm:$0xf]
    %v84 = vld [vmem:[%s0 + $0xe4] sm:$0xf]
    %v85 = vld [vmem:[%s0 + $0xe8] sm:$0xf]
    %v86 = vld [vmem:[%s0 + $0xec] sm:$0xf]
    %v87 = vld [vmem:[%s0 + $0xf0] sm:$0xf]
    %v88 = vld [vmem:[%s0 + $0xf4] sm:$0xf]
    %v89 = vld [vmem:[%s0 + $0xf8] sm:$0xf]
    %v90 = vld [vmem:[%s0 + $0xfc] sm:$0xf]
    %v91 = vld [vmem:[%s1] sm:$0xf]
    %v92 = vld [vmem:[%s1 + $0x4] sm:$0xf]
    %v93 = vld [vmem:[%s1 + $0x8] sm:$0xf]
    %v94 = vld [vmem:[%s1 + $0xc] sm:$0xf]
    %v95 = vld [vmem:[%s1 + $0x10] sm:$0xf]
    %v96 = vld [vmem:[%s1 + $0x14] sm:$0xf]
    %v97 = vld [vmem:[%s1 + $0x18] sm:$0xf]
    %v98 = vld [vmem:[%s1 + $0x1c] sm:$0xf]
    %v99 = vld [vmem:[%s1 + $0x20] sm:$0xf]
    %v100 = vld [vmem:[%s1 + $0x24] sm:$0xf]
    %v101 = vld [vmem:[%s1 + $0x28] sm:$0xf]
    %v102 = vld [vmem:[%s1 + $0x2c] sm:$0xf]
    %v103 = vld [vmem:[%s1 + $0x30] sm:$0xf]
    %v104 = vld [vmem:[%s1 + $0x34] sm:$0xf]
    %v105 = vld [vmem:[%s1 + $0x38] sm:$0xf]
    %v106 = vld [vmem:[%s1 + $0x3c] sm:$0xf]
    %v107 = vld [vmem:[%s2] sm:$0x1]
    %v109 = vlaneseq
    %v110 = vshrl.u32 %v109, 7
    %v111 = vsub.s32 0, %v110
    %v112 = vrot.slane %v107, %v111
    %v178 = vunpack.c.l.b16 %v27
    %v179 = vunpack.c.l.b16 %v28
    %v180 = vunpack.c.l.b16 %v29
    %v181 = vunpack.c.l.b16 %v30
    %v182 = vunpack.c.l.b16 %v31
    %v183 = vunpack.c.l.b16 %v32
    %v184 = vunpack.c.l.b16 %v33
    %v185 = vunpack.c.l.b16 %v34
    %v186 = vunpack.c.l.b16 %v35
    %v187 = vunpack.c.l.b16 %v36
    %v188 = vunpack.c.l.b16 %v37
    %v189 = vunpack.c.l.b16 %v38
    %v190 = vunpack.c.l.b16 %v39
    %v191 = vunpack.c.l.b16 %v40
    %v192 = vunpack.c.l.b16 %v41
    %v193 = vunpack.c.l.b16 %v42
    %v194 = vunpack.c.l.b16 %v43
    %v195 = vunpack.c.l.b16 %v44
    %v196 = vunpack.c.l.b16 %v45
    %v197 = vunpack.c.l.b16 %v46
    %v198 = vunpack.c.l.b16 %v47
    %v199 = vunpack.c.l.b16 %v48
    %v200 = vunpack.c.l.b16 %v49
    %v201 = vunpack.c.l.b16 %v50
    %v202 = vunpack.c.l.b16 %v51
    %v203 = vunpack.c.l.b16 %v52
    %v204 = vunpack.c.l.b16 %v53
    %v205 = vunpack.c.l.b16 %v54
    %v206 = vunpack.c.l.b16 %v55
    %v207 = vunpack.c.l.b16 %v56
    %v208 = vunpack.c.l.b16 %v57
    %v209 = vunpack.c.l.b16 %v58
    %v210 = vunpack.c.l.b16 %v59
    %v211 = vunpack.c.l.b16 %v60
    %v212 = vunpack.c.l.b16 %v61
    %v213 = vunpack.c.l.b16 %v62
    %v214 = vunpack.c.l.b16 %v63
    %v215 = vunpack.c.l.b16 %v64
    %v216 = vunpack.c.l.b16 %v65
    %v217 = vunpack.c.l.b16 %v66
    %v218 = vunpack.c.l.b16 %v67
    %v219 = vunpack.c.l.b16 %v68
    %v220 = vunpack.c.l.b16 %v69
    %v221 = vunpack.c.l.b16 %v70
    %v222 = vunpack.c.l.b16 %v71
    %v223 = vunpack.c.l.b16 %v72
    %v224 = vunpack.c.l.b16 %v73
    %v225 = vunpack.c.l.b16 %v74
    %v226 = vunpack.c.l.b16 %v75
    %v227 = vunpack.c.l.b16 %v76
    %v228 = vunpack.c.l.b16 %v77
    %v229 = vunpack.c.l.b16 %v78
    %v230 = vunpack.c.l.b16 %v79
    %v231 = vunpack.c.l.b16 %v80
    %v232 = vunpack.c.l.b16 %v81
    %v233 = vunpack.c.l.b16 %v82
    %v234 = vunpack.c.l.b16 %v83
    %v235 = vunpack.c.l.b16 %v84
    %v236 = vunpack.c.l.b16 %v85
    %v237 = vunpack.c.l.b16 %v86
    %v238 = vunpack.c.l.b16 %v87
    %v239 = vunpack.c.l.b16 %v88
    %v240 = vunpack.c.l.b16 %v89
    %v241 = vunpack.c.l.b16 %v90
    %v242 = vpack.c.b16 %v179, %v178
    %v243 = vpack.c.b16 %v181, %v180
    %v244 = vpack.c.b16 %v183, %v182
    %v245 = vpack.c.b16 %v185, %v184
    %v246 = vpack.c.b16 %v187, %v186
    %v247 = vpack.c.b16 %v189, %v188
    %v248 = vpack.c.b16 %v191, %v190
    %v249 = vpack.c.b16 %v193, %v192
    %v250 = vpack.c.b16 %v195, %v194
    %v251 = vpack.c.b16 %v197, %v196
    %v252 = vpack.c.b16 %v199, %v198
    %v253 = vpack.c.b16 %v201, %v200
    %v254 = vpack.c.b16 %v203, %v202
    %v255 = vpack.c.b16 %v205, %v204
    %v256 = vpack.c.b16 %v207, %v206
    %v257 = vpack.c.b16 %v209, %v208
    %v258 = vpack.c.b16 %v211, %v210
    %v259 = vpack.c.b16 %v213, %v212
    %v260 = vpack.c.b16 %v215, %v214
    %v261 = vpack.c.b16 %v217, %v216
    %v262 = vpack.c.b16 %v219, %v218
    %v263 = vpack.c.b16 %v221, %v220
    %v264 = vpack.c.b16 %v223, %v222
    %v265 = vpack.c.b16 %v225, %v224
    %v266 = vpack.c.b16 %v227, %v226
    %v267 = vpack.c.b16 %v229, %v228
    %v268 = vpack.c.b16 %v231, %v230
    %v269 = vpack.c.b16 %v233, %v232
    %v270 = vpack.c.b16 %v235, %v234
    %v271 = vpack.c.b16 %v237, %v236
    %v272 = vpack.c.b16 %v239, %v238
    %v273 = vpack.c.b16 %v241, %v240
    %v322 = vunpack.c.l.b16 %v91
    %v323 = vunpack.c.l.b16 %v92
    %v324 = vunpack.c.l.b16 %v93
    %v325 = vunpack.c.l.b16 %v94
    %v326 = vunpack.c.l.b16 %v95
    %v327 = vunpack.c.l.b16 %v96
    %v328 = vunpack.c.l.b16 %v97
    %v329 = vunpack.c.l.b16 %v98
    %v330 = vunpack.c.l.b16 %v99
    %v331 = vunpack.c.l.b16 %v100
    %v332 = vunpack.c.l.b16 %v101
    %v333 = vunpack.c.l.b16 %v102
    %v334 = vunpack.c.l.b16 %v103
    %v335 = vunpack.c.l.b16 %v104
    %v336 = vunpack.c.l.b16 %v105
    %v337 = vunpack.c.l.b16 %v106
    %v338 = vpack.c.b16 %v323, %v322
    %v339 = vpack.c.b16 %v325, %v324
    %v340 = vpack.c.b16 %v327, %v326
    %v341 = vpack.c.b16 %v329, %v328
    %v342 = vpack.c.b16 %v331, %v330
    %v343 = vpack.c.b16 %v333, %v332
    %v344 = vpack.c.b16 %v335, %v334
    %v345 = vpack.c.b16 %v337, %v336
    %354 = vmatprep.subr.bf16.mxu0 0
    %355 = vmatpush1.bf16.msra.mxu0 %v345
    %356 = vmatprep.subr.bf16.mxu0 0
    %357 = vmatpush1.bf16.msra.mxu0 %v344
    %358 = vmatprep.subr.bf16.mxu0 0
    %359 = vmatpush1.bf16.msra.mxu0 %v343
    %360 = vmatprep.subr.bf16.mxu0 0
    %361 = vmatpush1.bf16.msra.mxu0 %v342
    %362 = vmatprep.subr.bf16.mxu0 0
    %363 = vmatpush1.bf16.msra.mxu0 %v341
    %364 = vmatprep.subr.bf16.mxu0 0
    %365 = vmatpush1.bf16.msra.mxu0 %v340
    %366 = vmatprep.subr.bf16.mxu0 0
    %367 = vmatpush1.bf16.msra.mxu0 %v339
    %368 = vmatprep.subr.bf16.mxu0 0
    %369 = vmatpush1.bf16.msra.mxu0 %v338
    %370 = vmatprep.subr.bf16.mxu0 0
    %371 = vmatpush2.bf16.msra.mxu0 0
    %372 = vmatprep.subr.bf16.mxu0 0
    %373 = vmatpush2.bf16.msra.mxu0 0
    %374 = vmatprep.subr.bf16.mxu0 0
    %375 = vmatpush2.bf16.msra.mxu0 0
    %376 = vmatprep.subr.bf16.mxu0 0
    %377 = vmatpush2.bf16.msra.mxu0 0
    %378 = vmatprep.subr.bf16.mxu0 0
    %379 = vmatpush2.bf16.msra.mxu0 0
    %380 = vmatprep.subr.bf16.mxu0 0
    %381 = vmatpush2.bf16.msra.mxu0 0
    %382 = vmatprep.subr.bf16.mxu0 0
    %383 = vmatpush2.bf16.msra.mxu0 0
    %384 = vmatprep.subr.bf16.mxu0 0
    %385 = vmatpush2.bf16.msra.mxu0 0
    %386 = vmatprep.mubr.bf16.mxu0 0
    %387 = vmatmul.mubr.bf16.gmra.mxu0 %v242
    %v388 = vpop.f32.mrf.mxu0
    %v389 = vadd.f32 %v112, %v388
    %v390 = vpop.f32.mrf.mxu0
    %v391 = vpop.f32.mrf.mxu0
    %v392 = vadd.f32 %v112, %v391
    %v393 = vpop.f32.mrf.mxu0
    %394 = vmatprep.mubr.bf16.mxu0 0
    %395 = vmatmul.mubr.bf16.gmra.mxu0 %v243
    %v396 = vpop.f32.mrf.mxu0
    %v397 = vadd.f32 %v112, %v396
    %v398 = vpop.f32.mrf.mxu0
    %v399 = vpop.f32.mrf.mxu0
    %v400 = vadd.f32 %v112, %v399
    %v401 = vpop.f32.mrf.mxu0
    %402 = vmatprep.mubr.bf16.mxu0 0
    %403 = vmatmul.mubr.bf16.gmra.mxu0 %v244
    %v404 = vpop.f32.mrf.mxu0
    %v405 = vadd.f32 %v112, %v404
    %v406 = vpop.f32.mrf.mxu0
    %v407 = vpop.f32.mrf.mxu0
    %v408 = vadd.f32 %v112, %v407
    %v409 = vpop.f32.mrf.mxu0
    %410 = vmatprep.mubr.bf16.mxu0 0
    %411 = vmatmul.mubr.bf16.gmra.mxu0 %v245
    %v412 = vpop.f32.mrf.mxu0
    %v413 = vadd.f32 %v112, %v412
    %v414 = vpop.f32.mrf.mxu0
    %v415 = vpop.f32.mrf.mxu0
    %v416 = vadd.f32 %v112, %v415
    %v417 = vpop.f32.mrf.mxu0
    %418 = vmatprep.mubr.bf16.mxu0 0
    %419 = vmatmul.mubr.bf16.gmra.mxu0 %v246
    %v420 = vpop.f32.mrf.mxu0
    %v421 = vadd.f32 %v112, %v420
    %v422 = vpop.f32.mrf.mxu0
    %v423 = vpop.f32.mrf.mxu0
    %v424 = vadd.f32 %v112, %v423
    %v425 = vpop.f32.mrf.mxu0
    %426 = vmatprep.mubr.bf16.mxu0 0
    %427 = vmatmul.mubr.bf16.gmra.mxu0 %v247
    %v428 = vpop.f32.mrf.mxu0
    %v429 = vadd.f32 %v112, %v428
    %v430 = vpop.f32.mrf.mxu0
    %v431 = vpop.f32.mrf.mxu0
    %v432 = vadd.f32 %v112, %v431
    %v433 = vpop.f32.mrf.mxu0
    %434 = vmatprep.mubr.bf16.mxu0 0
    %435 = vmatmul.mubr.bf16.gmra.mxu0 %v248
    %v436 = vpop.f32.mrf.mxu0
    %v437 = vadd.f32 %v112, %v436
    %v438 = vpop.f32.mrf.mxu0
    %v439 = vpop.f32.mrf.mxu0
    %v440 = vadd.f32 %v112, %v439
    %v441 = vpop.f32.mrf.mxu0
    %442 = vmatprep.mubr.bf16.mxu0 0
    %443 = vmatmul.mubr.bf16.gmra.mxu0 %v249
    %v444 = vpop.f32.mrf.mxu0
    %v445 = vadd.f32 %v112, %v444
    %v446 = vpop.f32.mrf.mxu0
    %v447 = vpop.f32.mrf.mxu0
    %v448 = vadd.f32 %v112, %v447
    %v449 = vpop.f32.mrf.mxu0
    %450 = vmatprep.mubr.bf16.mxu0 0
    %451 = vmatmul.mubr.bf16.gmra.mxu0 %v250
    %v452 = vpop.f32.mrf.mxu0
    %v453 = vadd.f32 %v112, %v452
    %v454 = vpop.f32.mrf.mxu0
    %v455 = vpop.f32.mrf.mxu0
    %v456 = vadd.f32 %v112, %v455
    %v457 = vpop.f32.mrf.mxu0
    %458 = vmatprep.mubr.bf16.mxu0 0
    %459 = vmatmul.mubr.bf16.gmra.mxu0 %v251
    %v460 = vpop.f32.mrf.mxu0
    %v461 = vadd.f32 %v112, %v460
    %v462 = vpop.f32.mrf.mxu0
    %v463 = vpop.f32.mrf.mxu0
    %v464 = vadd.f32 %v112, %v463
    %v465 = vpop.f32.mrf.mxu0
    %466 = vmatprep.mubr.bf16.mxu0 0
    %467 = vmatmul.mubr.bf16.gmra.mxu0 %v252
    %v468 = vpop.f32.mrf.mxu0
    %v469 = vadd.f32 %v112, %v468
    %v470 = vpop.f32.mrf.mxu0
    %v471 = vpop.f32.mrf.mxu0
    %v472 = vadd.f32 %v112, %v471
    %v473 = vpop.f32.mrf.mxu0
    %474 = vmatprep.mubr.bf16.mxu0 0
    %475 = vmatmul.mubr.bf16.gmra.mxu0 %v253
    %v476 = vpop.f32.mrf.mxu0
    %v477 = vadd.f32 %v112, %v476
    %v478 = vpop.f32.mrf.mxu0
    %v479 = vpop.f32.mrf.mxu0
    %v480 = vadd.f32 %v112, %v479
    %v481 = vpop.f32.mrf.mxu0
    %482 = vmatprep.mubr.bf16.mxu0 0
    %483 = vmatmul.mubr.bf16.gmra.mxu0 %v254
    %v484 = vpop.f32.mrf.mxu0
    %v485 = vadd.f32 %v112, %v484
    %v486 = vpop.f32.mrf.mxu0
    %v487 = vpop.f32.mrf.mxu0
    %v488 = vadd.f32 %v112, %v487
    %v489 = vpop.f32.mrf.mxu0
    %490 = vmatprep.mubr.bf16.mxu0 0
    %491 = vmatmul.mubr.bf16.gmra.mxu0 %v255
    %v492 = vpop.f32.mrf.mxu0
    %v493 = vadd.f32 %v112, %v492
    %v494 = vpop.f32.mrf.mxu0
    %v495 = vpop.f32.mrf.mxu0
    %v496 = vadd.f32 %v112, %v495
    %v497 = vpop.f32.mrf.mxu0
    %498 = vmatprep.mubr.bf16.mxu0 0
    %499 = vmatmul.mubr.bf16.gmra.mxu0 %v256
    %v500 = vpop.f32.mrf.mxu0
    %v501 = vadd.f32 %v112, %v500
    %v502 = vpop.f32.mrf.mxu0
    %v503 = vpop.f32.mrf.mxu0
    %v504 = vadd.f32 %v112, %v503
    %v505 = vpop.f32.mrf.mxu0
    %506 = vmatprep.mubr.bf16.mxu0 0
    %507 = vmatmul.mubr.bf16.gmra.mxu0 %v257
    %v508 = vpop.f32.mrf.mxu0
    %v509 = vadd.f32 %v112, %v508
    %v510 = vpop.f32.mrf.mxu0
    %v511 = vpop.f32.mrf.mxu0
    %v512 = vadd.f32 %v112, %v511
    %v513 = vpop.f32.mrf.mxu0
    %514 = vmatprep.mubr.bf16.mxu0 0
    %515 = vmatmul.mubr.bf16.gmra.mxu0 %v258
    %v516 = vpop.f32.mrf.mxu0
    %v517 = vadd.f32 %v112, %v516
    %v518 = vpop.f32.mrf.mxu0
    %v519 = vpop.f32.mrf.mxu0
    %v520 = vadd.f32 %v112, %v519
    %v521 = vpop.f32.mrf.mxu0
    %522 = vmatprep.mubr.bf16.mxu0 0
    %523 = vmatmul.mubr.bf16.gmra.mxu0 %v259
    %v524 = vpop.f32.mrf.mxu0
    %v525 = vadd.f32 %v112, %v524
    %v526 = vpop.f32.mrf.mxu0
    %v527 = vpop.f32.mrf.mxu0
    %v528 = vadd.f32 %v112, %v527
    %v529 = vpop.f32.mrf.mxu0
    %530 = vmatprep.mubr.bf16.mxu0 0
    %531 = vmatmul.mubr.bf16.gmra.mxu0 %v260
    %v532 = vpop.f32.mrf.mxu0
    %v533 = vadd.f32 %v112, %v532
    %v534 = vpop.f32.mrf.mxu0
    %v535 = vpop.f32.mrf.mxu0
    %v536 = vadd.f32 %v112, %v535
    %v537 = vpop.f32.mrf.mxu0
    %538 = vmatprep.mubr.bf16.mxu0 0
    %539 = vmatmul.mubr.bf16.gmra.mxu0 %v261
    %v540 = vpop.f32.mrf.mxu0
    %v541 = vadd.f32 %v112, %v540
    %v542 = vpop.f32.mrf.mxu0
    %v543 = vpop.f32.mrf.mxu0
    %v544 = vadd.f32 %v112, %v543
    %v545 = vpop.f32.mrf.mxu0
    %546 = vmatprep.mubr.bf16.mxu0 0
    %547 = vmatmul.mubr.bf16.gmra.mxu0 %v262
    %v548 = vpop.f32.mrf.mxu0
    %v549 = vadd.f32 %v112, %v548
    %v550 = vpop.f32.mrf.mxu0
    %v551 = vpop.f32.mrf.mxu0
    %v552 = vadd.f32 %v112, %v551
    %v553 = vpop.f32.mrf.mxu0
    %554 = vmatprep.mubr.bf16.mxu0 0
    %555 = vmatmul.mubr.bf16.gmra.mxu0 %v263
    %v556 = vpop.f32.mrf.mxu0
    %v557 = vadd.f32 %v112, %v556
    %v558 = vpop.f32.mrf.mxu0
    %v559 = vpop.f32.mrf.mxu0
    %v560 = vadd.f32 %v112, %v559
    %v561 = vpop.f32.mrf.mxu0
    %562 = vmatprep.mubr.bf16.mxu0 0
    %563 = vmatmul.mubr.bf16.gmra.mxu0 %v264
    %v564 = vpop.f32.mrf.mxu0
    %v565 = vadd.f32 %v112, %v564
    %v566 = vpop.f32.mrf.mxu0
    %v567 = vpop.f32.mrf.mxu0
    %v568 = vadd.f32 %v112, %v567
    %v569 = vpop.f32.mrf.mxu0
    %570 = vmatprep.mubr.bf16.mxu0 0
    %571 = vmatmul.mubr.bf16.gmra.mxu0 %v265
    %v572 = vpop.f32.mrf.mxu0
    %v573 = vadd.f32 %v112, %v572
    %v574 = vpop.f32.mrf.mxu0
    %v575 = vpop.f32.mrf.mxu0
    %v576 = vadd.f32 %v112, %v575
    %v577 = vpop.f32.mrf.mxu0
    %578 = vmatprep.mubr.bf16.mxu0 0
    %579 = vmatmul.mubr.bf16.gmra.mxu0 %v266
    %v580 = vpop.f32.mrf.mxu0
    %v581 = vadd.f32 %v112, %v580
    %v582 = vpop.f32.mrf.mxu0
    %v583 = vpop.f32.mrf.mxu0
    %v584 = vadd.f32 %v112, %v583
    %v585 = vpop.f32.mrf.mxu0
    %586 = vmatprep.mubr.bf16.mxu0 0
    %587 = vmatmul.mubr.bf16.gmra.mxu0 %v267
    %v588 = vpop.f32.mrf.mxu0
    %v589 = vadd.f32 %v112, %v588
    %v590 = vpop.f32.mrf.mxu0
    %v591 = vpop.f32.mrf.mxu0
    %v592 = vadd.f32 %v112, %v591
    %v593 = vpop.f32.mrf.mxu0
    %594 = vmatprep.mubr.bf16.mxu0 0
    %595 = vmatmul.mubr.bf16.gmra.mxu0 %v268
    %v596 = vpop.f32.mrf.mxu0
    %v597 = vadd.f32 %v112, %v596
    %v598 = vpop.f32.mrf.mxu0
    %v599 = vpop.f32.mrf.mxu0
    %v600 = vadd.f32 %v112, %v599
    %v601 = vpop.f32.mrf.mxu0
    %602 = vmatprep.mubr.bf16.mxu0 0
    %603 = vmatmul.mubr.bf16.gmra.mxu0 %v269
    %v604 = vpop.f32.mrf.mxu0
    %v605 = vadd.f32 %v112, %v604
    %v606 = vpop.f32.mrf.mxu0
    %v607 = vpop.f32.mrf.mxu0
    %v608 = vadd.f32 %v112, %v607
    %v609 = vpop.f32.mrf.mxu0
    %610 = vmatprep.mubr.bf16.mxu0 0
    %611 = vmatmul.mubr.bf16.gmra.mxu0 %v270
    %v612 = vpop.f32.mrf.mxu0
    %v613 = vadd.f32 %v112, %v612
    %v614 = vpop.f32.mrf.mxu0
    %v615 = vpop.f32.mrf.mxu0
    %v616 = vadd.f32 %v112, %v615
    %v617 = vpop.f32.mrf.mxu0
    %618 = vmatprep.mubr.bf16.mxu0 0
    %619 = vmatmul.mubr.bf16.gmra.mxu0 %v271
    %v620 = vpop.f32.mrf.mxu0
    %v621 = vadd.f32 %v112, %v620
    %v622 = vpop.f32.mrf.mxu0
    %v623 = vpop.f32.mrf.mxu0
    %v624 = vadd.f32 %v112, %v623
    %v625 = vpop.f32.mrf.mxu0
    %626 = vmatprep.mubr.bf16.mxu0 0
    %627 = vmatmul.mubr.bf16.gmra.mxu0 %v272
    %v628 = vpop.f32.mrf.mxu0
    %v629 = vadd.f32 %v112, %v628
    %v630 = vpop.f32.mrf.mxu0
    %v631 = vpop.f32.mrf.mxu0
    %v632 = vadd.f32 %v112, %v631
    %v633 = vpop.f32.mrf.mxu0
    %634 = vmatprep.mubr.bf16.mxu0 0
    %635 = vmatmul.mubr.bf16.gmra.mxu0 %v273
    %v636 = vpop.f32.mrf.mxu0
    %v637 = vadd.f32 %v112, %v636
    %v638 = vpop.f32.mrf.mxu0
    %v639 = vpop.f32.mrf.mxu0
    %v640 = vadd.f32 %v112, %v639
    %v641 = vpop.f32.mrf.mxu0
    %642 = vdwg.mxu0
    %v643 = vmax.f32 %v389, 0.0
    %v644 = vmax.f32 %v392, 0.0
    %v645 = vmax.f32 %v397, 0.0
    %v646 = vmax.f32 %v400, 0.0
    %v647 = vmax.f32 %v405, 0.0
    %v648 = vmax.f32 %v408, 0.0
    %v649 = vmax.f32 %v413, 0.0
    %v650 = vmax.f32 %v416, 0.0
    %v651 = vmax.f32 %v421, 0.0
    %v652 = vmax.f32 %v424, 0.0
    %v653 = vmax.f32 %v429, 0.0
    %v654 = vmax.f32 %v432, 0.0
    %v655 = vmax.f32 %v437, 0.0
    %v656 = vmax.f32 %v440, 0.0
    %v657 = vmax.f32 %v445, 0.0
    %v658 = vmax.f32 %v448, 0.0
    %v659 = vmax.f32 %v453, 0.0
    %v660 = vmax.f32 %v456, 0.0
    %v661 = vmax.f32 %v461, 0.0
    %v662 = vmax.f32 %v464, 0.0
    %v663 = vmax.f32 %v469, 0.0
    %v664 = vmax.f32 %v472, 0.0
    %v665 = vmax.f32 %v477, 0.0
    %v666 = vmax.f32 %v480, 0.0
    %v667 = vmax.f32 %v485, 0.0
    %v668 = vmax.f32 %v488, 0.0
    %v669 = vmax.f32 %v493, 0.0
    %v670 = vmax.f32 %v496, 0.0
    %v671 = vmax.f32 %v501, 0.0
    %v672 = vmax.f32 %v504, 0.0
    %v673 = vmax.f32 %v509, 0.0
    %v674 = vmax.f32 %v512, 0.0
    %v675 = vmax.f32 %v517, 0.0
    %v676 = vmax.f32 %v520, 0.0
    %v677 = vmax.f32 %v525, 0.0
    %v678 = vmax.f32 %v528, 0.0
    %v679 = vmax.f32 %v533, 0.0
    %v680 = vmax.f32 %v536, 0.0
    %v681 = vmax.f32 %v541, 0.0
    %v682 = vmax.f32 %v544, 0.0
    %v683 = vmax.f32 %v549, 0.0
    %v684 = vmax.f32 %v552, 0.0
    %v685 = vmax.f32 %v557, 0.0
    %v686 = vmax.f32 %v560, 0.0
    %v687 = vmax.f32 %v565, 0.0
    %v688 = vmax.f32 %v568, 0.0
    %v689 = vmax.f32 %v573, 0.0
    %v690 = vmax.f32 %v576, 0.0
    %v691 = vmax.f32 %v581, 0.0
    %v692 = vmax.f32 %v584, 0.0
    %v693 = vmax.f32 %v589, 0.0
    %v694 = vmax.f32 %v592, 0.0
    %v695 = vmax.f32 %v597, 0.0
    %v696 = vmax.f32 %v600, 0.0
    %v697 = vmax.f32 %v605, 0.0
    %v698 = vmax.f32 %v608, 0.0
    %v699 = vmax.f32 %v613, 0.0
    %v700 = vmax.f32 %v616, 0.0
    %v701 = vmax.f32 %v621, 0.0
    %v702 = vmax.f32 %v624, 0.0
    %v703 = vmax.f32 %v629, 0.0
    %v704 = vmax.f32 %v632, 0.0
    %v705 = vmax.f32 %v637, 0.0
    %v706 = vmax.f32 %v640, 0.0
    %v707 = vld [vmem:[#allocation2] sm:$0x3]
    %v708 = vadd.f32 %v643, %v644
    %v709 = vadd.f32 %v708, %v645
    %v710 = vadd.f32 %v709, %v646
    %v711 = vadd.f32 %v710, %v647
    %v712 = vadd.f32 %v711, %v648
    %v713 = vadd.f32 %v712, %v649
    %v714 = vadd.f32 %v713, %v650
    %v715 = vadd.f32 %v714, %v651
    %v716 = vadd.f32 %v715, %v652
    %v717 = vadd.f32 %v716, %v653
    %v718 = vadd.f32 %v717, %v654
    %v719 = vadd.f32 %v718, %v655
    %v720 = vadd.f32 %v719, %v656
    %v721 = vadd.f32 %v720, %v657
    %v722 = vadd.f32 %v721, %v658
    %v723 = vadd.f32 %v722, %v659
    %v724 = vadd.f32 %v723, %v660
    %v725 = vadd.f32 %v724, %v661
    %v726 = vadd.f32 %v725, %v662
    %v727 = vadd.f32 %v726, %v663
    %v728 = vadd.f32 %v727, %v664
    %v729 = vadd.f32 %v728, %v665
    %v730 = vadd.f32 %v729, %v666
    %v731 = vadd.f32 %v730, %v667
    %v732 = vadd.f32 %v731, %v668
    %v733 = vadd.f32 %v732, %v669
    %v734 = vadd.f32 %v733, %v670
    %v735 = vadd.f32 %v734, %v671
    %v736 = vadd.f32 %v735, %v672
    %v737 = vadd.f32 %v736, %v673
    %v738 = vadd.f32 %v737, %v674
    %v739 = vrot.slane %v738, 4
    %v740 = vadd.f32 %v738, %v739
    %v741 = vrot.slane %v740, 2
    %v742 = vadd.f32 %v740, %v741
    %v743 = vrot.slane %v742, 1
    %v744 = vadd.f32 %v742, %v743
    %v745 = vadd.f32 %v675, %v676
    %v746 = vadd.f32 %v745, %v677
    %v747 = vadd.f32 %v746, %v678
    %v748 = vadd.f32 %v747, %v679
    %v749 = vadd.f32 %v748, %v680
    %v750 = vadd.f32 %v749, %v681
    %v751 = vadd.f32 %v750, %v682
    %v752 = vadd.f32 %v751, %v683
    %v753 = vadd.f32 %v752, %v684
    %v754 = vadd.f32 %v753, %v685
    %v755 = vadd.f32 %v754, %v686
    %v756 = vadd.f32 %v755, %v687
    %v757 = vadd.f32 %v756, %v688
    %v758 = vadd.f32 %v757, %v689
    %v759 = vadd.f32 %v758, %v690
    %v760 = vadd.f32 %v759, %v691
    %v761 = vadd.f32 %v760, %v692
    %v762 = vadd.f32 %v761, %v693
    %v763 = vadd.f32 %v762, %v694
    %v764 = vadd.f32 %v763, %v695
    %v765 = vadd.f32 %v764, %v696
    %v766 = vadd.f32 %v765, %v697
    %v767 = vadd.f32 %v766, %v698
    %v768 = vadd.f32 %v767, %v699
    %v769 = vadd.f32 %v768, %v700
    %v770 = vadd.f32 %v769, %v701
    %v771 = vadd.f32 %v770, %v702
    %v772 = vadd.f32 %v771, %v703
    %v773 = vadd.f32 %v772, %v704
    %v774 = vadd.f32 %v773, %v705
    %v775 = vadd.f32 %v774, %v706
    %v776 = vrot.slane %v775, 4
    %v777 = vadd.f32 %v775, %v776
    %v778 = vrot.slane %v777, 2
    %v779 = vadd.f32 %v777, %v778
    %v780 = vrot.slane %v779, 1
    %v781 = vadd.f32 %v779, %v780
    %vm784 = vcmask 1041409
    %v785 = vsel %vm784, %v781, %v744
    %v787 = vadd.f32 %v707, %v785
    %788 = vst [vmem:[#allocation2] sm:$0x3] %v787
    // Predicated region
    $region26: #{wrapped_model_forward.1} parent=1 // pred_check
      %p789 = pneg %p22
    $region27: #{wrapped_model_forward.1} parent=1 // pred_check_branch
      %791 = sbr.rel (%p789) target = $region29
    $region28: #{wrapped_model_forward.1} parent=1 // pred_region
      %v792 = vld [vmem:[#allocation2] sm:$0x3]
      %v793 = vmul.f32 %v792, 0.00390625
      %v794 = vld [vmem:[%s3] sm:$0xff]
      %v795 = vld [vmem:[%s3 + $0x8] sm:$0xff]
      %v796 = vld [vmem:[%s3 + $0x10] sm:$0xff]
      %v797 = vld [vmem:[%s3 + $0x18] sm:$0xff]
      %v798 = vld [vmem:[%s3 + $0x20] sm:$0xff]
      %v799 = vld [vmem:[%s3 + $0x28] sm:$0xff]
      %v800 = vld [vmem:[%s3 + $0x30] sm:$0xff]
      %v801 = vld [vmem:[%s3 + $0x38] sm:$0xff]
      %v802 = vld [vmem:[%s3 + $0x40] sm:$0xff]
      %v803 = vld [vmem:[%s3 + $0x48] sm:$0xff]
      %v804 = vld [vmem:[%s3 + $0x50] sm:$0xff]
      %v805 = vld [vmem:[%s3 + $0x58] sm:$0xff]
      %v806 = vld [vmem:[%s3 + $0x60] sm:$0xff]
      %v807 = vld [vmem:[%s3 + $0x68] sm:$0xff]
      %v808 = vld [vmem:[%s3 + $0x70] sm:$0xff]
      %v809 = vld [vmem:[%s3 + $0x78] sm:$0xff]
      %v810 = vld [vmem:[%s4] sm:$0x1]
      %v812 = vlaneseq
      %v813 = vshrl.u32 %v812, 7
      %v814 = vsub.s32 0, %v813
      %v815 = vrot.slane %v810, %v814
      %817 = vmatprep.subr.mxu0 0.0
      %818 = vmatpush1.msra.mxu0 %v809
      %819 = vmatprep.subr.mxu0 0.0
      %820 = vmatpush1.msra.mxu0 %v808
      %821 = vmatprep.subr.mxu0 0.0
      %822 = vmatpush1.msra.mxu0 %v807
      %823 = vmatprep.subr.mxu0 0.0
      %824 = vmatpush1.msra.mxu0 %v806
      %825 = vmatprep.subr.mxu0 0.0
      %826 = vmatpush1.msra.mxu0 %v805
      %827 = vmatprep.subr.mxu0 0.0
      %828 = vmatpush1.msra.mxu0 %v804
      %829 = vmatprep.subr.mxu0 0.0
      %830 = vmatpush1.msra.mxu0 %v803
      %831 = vmatprep.subr.mxu0 0.0
      %832 = vmatpush1.msra.mxu0 %v802
      %833 = vmatprep.subr.mxu0 0.0
      %834 = vmatpush1.msra.mxu0 %v801
      %835 = vmatprep.subr.mxu0 0.0
      %836 = vmatpush1.msra.mxu0 %v800
      %837 = vmatprep.subr.mxu0 0.0
      %838 = vmatpush1.msra.mxu0 %v799
      %839 = vmatprep.subr.mxu0 0.0
      %840 = vmatpush1.msra.mxu0 %v798
      %841 = vmatprep.subr.mxu0 0.0
      %842 = vmatpush1.msra.mxu0 %v797
      %843 = vmatprep.subr.mxu0 0.0
      %844 = vmatpush1.msra.mxu0 %v796
      %845 = vmatprep.subr.mxu0 0.0
      %846 = vmatpush1.msra.mxu0 %v795
      %847 = vmatprep.subr.mxu0 0.0
      %848 = vmatpush1.msra.mxu0 %v794
      %849 = vmatprep.subr.mxu0 0.0
      %850 = vmatpush2.msra.mxu0 0.0
      %851 = vmatprep.subr.mxu0 0.0
      %852 = vmatpush2.msra.mxu0 0.0
      %853 = vmatprep.subr.mxu0 0.0
      %854 = vmatpush2.msra.mxu0 0.0
      %855 = vmatprep.subr.mxu0 0.0
      %856 = vmatpush2.msra.mxu0 0.0
      %857 = vmatprep.subr.mxu0 0.0
      %858 = vmatpush2.msra.mxu0 0.0
      %859 = vmatprep.subr.mxu0 0.0
      %860 = vmatpush2.msra.mxu0 0.0
      %861 = vmatprep.subr.mxu0 0.0
      %862 = vmatpush2.msra.mxu0 0.0
      %863 = vmatprep.subr.mxu0 0.0
      %864 = vmatpush2.msra.mxu0 0.0
      %865 = vmatprep.subr.mxu0 0.0
      %866 = vmatpush2.msra.mxu0 0.0
      %867 = vmatprep.subr.mxu0 0.0
      %868 = vmatpush2.msra.mxu0 0.0
      %869 = vmatprep.subr.mxu0 0.0
      %870 = vmatpush2.msra.mxu0 0.0
      %871 = vmatprep.subr.mxu0 0.0
      %872 = vmatpush2.msra.mxu0 0.0
      %873 = vmatprep.subr.mxu0 0.0
      %874 = vmatpush2.msra.mxu0 0.0
      %875 = vmatprep.subr.mxu0 0.0
      %876 = vmatpush2.msra.mxu0 0.0
      %877 = vmatprep.subr.mxu0 0.0
      %878 = vmatpush2.msra.mxu0 0.0
      %879 = vmatprep.subr.mxu0 0.0
      %880 = vmatpush2.msra.mxu0 0.0
      %881 = vmatprep.mubr.f32.mxu0 0.0
      %882 = vmatmul.mubr.f32.gmra.mxu0 %v793
      %v883 = vpop.f32.mrf.mxu0
      %v884 = vadd.f32 %v815, %v883
      %v885 = vpop.f32.mrf.mxu0
      %886 = vdwg.mxu0
      %887 = vst [vmem:[#allocation3] sm:$0x3] %v884
    $region29: #{wrapped_model_forward.1} parent=1 // pred_fallthru
      _
    // Predicated region
    $region30: #{wrapped_model_forward.1} parent=1 // pred_check
      _
    $region31: #{wrapped_model_forward.1} parent=1 // pred_check_branch
      %889 = sbr.rel (0) target = $region33
    $region32: #{wrapped_model_forward.1} parent=1 // pred_region
      %s891 = ssub.s32 32, 32
      %892 = vsyncadd [#allocation4], %s891
      %s894 = sshll.u32 [#allocation3], 4
      %s895 = int_to_ptr.vmem [resolvable:$true] %s894
      %897 = dma.vmem_to_hbm [thread:$0]  %s895, 32, %s5, [#allocation4]
    $region33: #{wrapped_model_forward.1} parent=1 // pred_fallthru
      _
    // Predicated region
    $region34: #{wrapped_model_forward.1} parent=1 // pred_check
      _
    $region35: #{wrapped_model_forward.1} parent=1 // pred_check_branch
      %899 = sbr.rel (0) target = $region37
    $region36: #{wrapped_model_forward.1} parent=1 // pred_region
      %900 = dma.done [#allocation4], 32
    $region37: #{wrapped_model_forward.1} parent=1 // pred_fallthru
      _
    %901 = vsyncpa [#allocation4], 1

</llo_original>
